<compile_context>
chip_gen: v7x
topology: tpu7x:2x2x1
jax: 0.10.0
libtpu: 0.0.40
codegen_flags: <defaults>
</compile_context>

<pallas_src>
import jax
import jax.numpy as jnp
from jax.experimental import pallas as pl
from jax.experimental.pallas import tpu as pltpu


def _round_up(n: int, m: int) -> int:
    return ((n + m - 1) // m) * m


def _mapping_kernel(x_ref, wm_ref, bm_ref, ws_ref, bs_ref, mean_ref, std_ref):
    """mean = x @ Wm + bm ; std = softplus(x @ Ws + bs)  (torch threshold=20)."""
    x = x_ref[...]

    mean = jnp.dot(x, wm_ref[...], preferred_element_type=jnp.float32)
    mean = mean + bm_ref[...].astype(jnp.float32)

    z = jnp.dot(x, ws_ref[...], preferred_element_type=jnp.float32)
    z = z + bs_ref[...].astype(jnp.float32)

    # Numerically stable softplus matching torch.nn.Softplus(threshold=20).
    # The module's clip(min=0) is redundant after softplus and is omitted.
    sp = jnp.where(z > 20.0, z, jnp.log1p(jnp.exp(jnp.minimum(z, 20.0))))

    mean_ref[...] = mean.astype(mean_ref.dtype)
    std_ref[...] = sp.astype(std_ref.dtype)


def _pick_block_b(B, P, F, *, target_x_tile_bytes=2 << 20,
                  vmem_tile_budget_bytes=10 << 20, min_steps=1):
    """Rows per grid step, sized from bytes (not a fixed row cap):
       - x tile ~ target_x_tile_bytes of HBM traffic per step,
       - clamped so double-buffered x + both output tiles fit a VMEM budget
         that is safe on v5e / v6e / v7x."""
    bytes_per_row_x = 4 * P
    bytes_per_row_vmem = 2 * 4 * (P + 2 * F)      # 2x-buffered x + two f32 outs
    tb = max(8, _round_up(max(1, target_x_tile_bytes // bytes_per_row_x), 8))
    tb_vmem = max(8, (vmem_tile_budget_bytes // bytes_per_row_vmem) // 8 * 8)
    tb = min(tb, tb_vmem)
    if min_steps > 1 and B >= 8 * min_steps:       # keep >=2 steps for megacore
        tb = min(tb, _round_up(-(-B // min_steps), 8))
    if tb >= B:
        return B        # single full-extent block (also covers B % 8 != 0)
    return tb           # multiple of 8; Pallas masks the partial last block


def mapping_layer(pf_rets, w_mean, b_mean, w_std, b_std, *,
                  block_b=None, core_parallel=False):
    """pf_rets: (B, num_pfs); w_*: (num_pfs, num_facts); b_*: (num_facts,).

    Returns (mean, std), each (B, num_facts)."""
    B, P = pf_rets.shape
    F = w_mean.shape[1]
    dtype = pf_rets.dtype

    if block_b is None:
        TB = _pick_block_b(B, P, F, min_steps=2 if core_parallel else 1)
    else:
        TB = B if block_b >= B else max(8, (block_b // 8) * 8)

    grid = (pl.cdiv(B, TB),)

    bm = b_mean.reshape(1, F)
    bs = b_std.reshape(1, F)

    # v7x: shard batch grid over both TensorCores; v5e/v6e: plain "parallel".
    dim_sem = (pltpu.CORE_PARALLEL,) if core_parallel else ("parallel",)

    cost = pl.CostEstimate(
        flops=4 * B * P * F,                                   # two (B,P)x(P,F) dots
        transcendentals=2 * B * F,                             # exp + log1p
        bytes_accessed=4 * (B * P + 2 * P * F + 2 * F + 2 * B * F),
    )

    mean, std = pl.pallas_call(
        _mapping_kernel,
        out_shape=(
            jax.ShapeDtypeStruct((B, F), dtype),
            jax.ShapeDtypeStruct((B, F), dtype),
        ),
        grid=grid,
        in_specs=[
            pl.BlockSpec((TB, P), lambda i: (i, 0)),    # x: tiled / pipelined over batch
            pl.BlockSpec((P, F), lambda i: (0, 0)),     # w_mean: VMEM-resident
            pl.BlockSpec((1, F), lambda i: (0, 0)),     # b_mean: VMEM-resident
            pl.BlockSpec((P, F), lambda i: (0, 0)),     # w_std : VMEM-resident
            pl.BlockSpec((1, F), lambda i: (0, 0)),     # b_std : VMEM-resident
        ],
        out_specs=(
            pl.BlockSpec((TB, F), lambda i: (i, 0)),    # mean
            pl.BlockSpec((TB, F), lambda i: (i, 0)),    # std
        ),
        compiler_params=pltpu.CompilerParams(
            dimension_semantics=dim_sem,
            vmem_limit_bytes=32 * 1024 * 1024,          # lift v5e's 16 MiB scoped default
        ),
        cost_estimate=cost,
    )(pf_rets, w_mean, bm, w_std, bs)

    return mean, std


def init_params(key, num_pfs, num_facts, dtype=jnp.float32):
    # Deterministic init mimicking torch nn.Linear default: U(-1/sqrt(in), 1/sqrt(in))
    k1, k2, k3, k4 = jax.random.split(key, 4)
    bound = 1.0 / jnp.sqrt(jnp.array(num_pfs, dtype))
    w_mean = jax.random.uniform(k1, (num_pfs, num_facts), dtype, -bound, bound)
    b_mean = jax.random.uniform(k2, (num_facts,), dtype, -bound, bound)
    w_std = jax.random.uniform(k3, (num_pfs, num_facts), dtype, -bound, bound)
    b_std = jax.random.uniform(k4, (num_facts,), dtype, -bound, bound)
    return w_mean, b_mean, w_std, b_std


def _reference(pf_rets, w_mean, b_mean, w_std, b_std):
    ref_mean = pf_rets @ w_mean + b_mean
    ref_std = jnp.maximum(jax.nn.softplus(pf_rets @ w_std + b_std), 0.0)
    return ref_mean, ref_std


if __name__ == "__main__":
    key = jax.random.PRNGKey(0)
    k_x, k_x2, k_x3, k_p = jax.random.split(key, 4)

    batch, num_pfs, num_facts = 8, 32, 16
    pf_rets = jax.random.normal(k_x, (batch, num_pfs), jnp.float32)
    w_mean, b_mean, w_std, b_std = init_params(k_p, num_pfs, num_facts)

    mean, std = mapping_layer(pf_rets, w_mean, b_mean, w_std, b_std)
    jax.block_until_ready((mean, std))

    ref_mean, ref_std = _reference(pf_rets, w_mean, b_mean, w_std, b_std)
    assert mean.shape == (batch, num_facts) and std.shape == (batch, num_facts)
    assert jnp.allclose(mean, ref_mean, atol=1e-5, rtol=1e-5)
    assert jnp.allclose(std, ref_std, atol=1e-5, rtol=1e-5)
    assert bool(jnp.all(std >= 0))

    # check 2: batch not a multiple of 8 -> single full-extent block, no padding
    batch2 = 10
    pf_rets2 = jax.random.normal(k_x2, (batch2, num_pfs), jnp.float32)
    mean2, std2 = mapping_layer(pf_rets2, w_mean, b_mean, w_std, b_std)
    jax.block_until_ready((mean2, std2))
    ref_mean2, ref_std2 = _reference(pf_rets2, w_mean, b_mean, w_std, b_std)
    assert mean2.shape == (batch2, num_facts) and std2.shape == (batch2, num_facts)
    assert jnp.allclose(mean2, ref_mean2, atol=1e-5, rtol=1e-5)
    assert jnp.allclose(std2, ref_std2, atol=1e-5, rtol=1e-5)

    # check 3: multi-step grid with a masked partial last block (no pad / trim path)
    batch3 = 300
    pf_rets3 = jax.random.normal(k_x3, (batch3, num_pfs), jnp.float32)
    mean3, std3 = mapping_layer(pf_rets3, w_mean, b_mean, w_std, b_std, block_b=128)
    jax.block_until_ready((mean3, std3))
    ref_mean3, ref_std3 = _reference(pf_rets3, w_mean, b_mean, w_std, b_std)
    assert mean3.shape == (batch3, num_facts) and std3.shape == (batch3, num_facts)
    assert jnp.allclose(mean3, ref_mean3, atol=1e-5, rtol=1e-5)
    assert jnp.allclose(std3, ref_std3, atol=1e-5, rtol=1e-5)

    print("KERNEL_OK")
</pallas_src>

<mosaic_0001>
module attributes {stable_mosaic.version = 11 : i64} {
  func.func @_mapping_kernel(%arg0: i32, %arg1: memref<8x32xf32, #tpu.memory_space<vmem>>, %arg2: memref<32x16xf32, #tpu.memory_space<vmem>>, %arg3: memref<1x16xf32, #tpu.memory_space<vmem>>, %arg4: memref<32x16xf32, #tpu.memory_space<vmem>>, %arg5: memref<1x16xf32, #tpu.memory_space<vmem>>, %arg6: memref<8x16xf32, #tpu.memory_space<vmem>>, %arg7: memref<8x16xf32, #tpu.memory_space<vmem>>) attributes {dimension_semantics = [#tpu.dimension_semantics<parallel>], iteration_bounds = array<i64: 1>, scalar_prefetch = 0 : i64, scratch_operands = 0 : i64, tpu.core_type = #tpu.core_type<tc>, window_params = [{transform_indices = @transform_0, window_bounds = array<i64: 8, 32>}, {pipeline_mode = #tpu.pipeline_mode<synchronous>, transform_indices = @transform_1, window_bounds = array<i64: 32, 16>}, {pipeline_mode = #tpu.pipeline_mode<synchronous>, transform_indices = @transform_2, window_bounds = array<i64: 1, 16>}, {pipeline_mode = #tpu.pipeline_mode<synchronous>, transform_indices = @transform_3, window_bounds = array<i64: 32, 16>}, {pipeline_mode = #tpu.pipeline_mode<synchronous>, transform_indices = @transform_4, window_bounds = array<i64: 1, 16>}, {transform_indices = @transform_5, window_bounds = array<i64: 8, 16>}, {transform_indices = @transform_6, window_bounds = array<i64: 8, 16>}]} {
    %c0 = arith.constant 0 : index
    %c0_0 = arith.constant 0 : index
    %0 = vector.load %arg1[%c0, %c0_0] : memref<8x32xf32, #tpu.memory_space<vmem>>, vector<8x32xf32>
    %c0_1 = arith.constant 0 : index
    %c0_2 = arith.constant 0 : index
    %1 = vector.load %arg2[%c0_1, %c0_2] : memref<32x16xf32, #tpu.memory_space<vmem>>, vector<32x16xf32>
    %cst = arith.constant dense<0.000000e+00> : vector<8x16xf32>
    %2 = tpu.matmul %0, %1, %cst {dimension_numbers = #tpu.dot_dimension_numbers<[1], [0], [0], [1], [0, 0, 1, 1], [], []>} : vector<8x32xf32>, vector<32x16xf32>, vector<8x16xf32> -> vector<8x16xf32>
    %c0_3 = arith.constant 0 : index
    %c0_4 = arith.constant 0 : index
    %3 = vector.load %arg3[%c0_3, %c0_4] : memref<1x16xf32, #tpu.memory_space<vmem>>, vector<1x16xf32>
    %4 = vector.broadcast %3 : vector<1x16xf32> to vector<8x16xf32>
    %5 = arith.addf %2, %4 : vector<8x16xf32>
    %c0_5 = arith.constant 0 : index
    %c0_6 = arith.constant 0 : index
    %6 = vector.load %arg4[%c0_5, %c0_6] : memref<32x16xf32, #tpu.memory_space<vmem>>, vector<32x16xf32>
    %cst_7 = arith.constant dense<0.000000e+00> : vector<8x16xf32>
    %7 = tpu.matmul %0, %6, %cst_7 {dimension_numbers = #tpu.dot_dimension_numbers<[1], [0], [0], [1], [0, 0, 1, 1], [], []>} : vector<8x32xf32>, vector<32x16xf32>, vector<8x16xf32> -> vector<8x16xf32>
    %c0_8 = arith.constant 0 : index
    %c0_9 = arith.constant 0 : index
    %8 = vector.load %arg5[%c0_8, %c0_9] : memref<1x16xf32, #tpu.memory_space<vmem>>, vector<1x16xf32>
    %9 = vector.broadcast %8 : vector<1x16xf32> to vector<8x16xf32>
    %10 = arith.addf %7, %9 : vector<8x16xf32>
    %cst_10 = arith.constant 2.000000e+01 : f32
    %11 = vector.broadcast %cst_10 : f32 to vector<8x16xf32>
    %12 = arith.cmpf ogt, %10, %11 : vector<8x16xf32>
    %cst_11 = arith.constant 2.000000e+01 : f32
    %13 = vector.broadcast %cst_11 : f32 to vector<8x16xf32>
    %14 = arith.minimumf %10, %13 : vector<8x16xf32>
    %15 = math.exp %14 : vector<8x16xf32>
    %16 = math.log1p %15 : vector<8x16xf32>
    %17 = arith.select %12, %10, %16 : vector<8x16xi1>, vector<8x16xf32>
    %c0_12 = arith.constant 0 : index
    %c0_13 = arith.constant 0 : index
    %18 = vector.load %arg6[%c0_12, %c0_13] : memref<8x16xf32, #tpu.memory_space<vmem>>, vector<8x16xf32>
    tpu.vector_store %arg6[%c0_12, %c0_13], %5 {strides = array<i32>} : memref<8x16xf32, #tpu.memory_space<vmem>>, vector<8x16xf32>,
    %c0_14 = arith.constant 0 : index
    %c0_15 = arith.constant 0 : index
    %19 = vector.load %arg7[%c0_14, %c0_15] : memref<8x16xf32, #tpu.memory_space<vmem>>, vector<8x16xf32>
    tpu.vector_store %arg7[%c0_14, %c0_15], %17 {strides = array<i32>} : memref<8x16xf32, #tpu.memory_space<vmem>>, vector<8x16xf32>,
    return
  }
  func.func @transform_0(%arg0: i32) -> (i32, i32) {
    %c0_i32 = arith.constant 0 : i32
    %c0_i32_0 = arith.constant 0 : i32
    return %arg0, %c0_i32 : i32, i32
  }
  func.func @transform_1(%arg0: i32) -> (i32, i32) {
    %c0_i32 = arith.constant 0 : i32
    %c0_i32_0 = arith.constant 0 : i32
    %c0_i32_1 = arith.constant 0 : i32
    return %c0_i32, %c0_i32_0 : i32, i32
  }
  func.func @transform_2(%arg0: i32) -> (i32, i32) {
    %c0_i32 = arith.constant 0 : i32
    %c0_i32_0 = arith.constant 0 : i32
    %c0_i32_1 = arith.constant 0 : i32
    return %c0_i32, %c0_i32_0 : i32, i32
  }
  func.func @transform_3(%arg0: i32) -> (i32, i32) {
    %c0_i32 = arith.constant 0 : i32
    %c0_i32_0 = arith.constant 0 : i32
    %c0_i32_1 = arith.constant 0 : i32
    return %c0_i32, %c0_i32_0 : i32, i32
  }
  func.func @transform_4(%arg0: i32) -> (i32, i32) {
    %c0_i32 = arith.constant 0 : i32
    %c0_i32_0 = arith.constant 0 : i32
    %c0_i32_1 = arith.constant 0 : i32
    return %c0_i32, %c0_i32_0 : i32, i32
  }
  func.func @transform_5(%arg0: i32) -> (i32, i32) {
    %c0_i32 = arith.constant 0 : i32
    %c0_i32_0 = arith.constant 0 : i32
    return %arg0, %c0_i32 : i32, i32
  }
  func.func @transform_6(%arg0: i32) -> (i32, i32) {
    %c0_i32 = arith.constant 0 : i32
    %c0_i32_0 = arith.constant 0 : i32
    return %arg0, %c0_i32 : i32, i32
  }
}

</mosaic_0001>

<llo_original>
// kernel: tpu_custom_call.1
$region0: #{tpu_custom_call.1}
  #allocation0 [shape = 'u32[]', space=smem, size = 0x4, offset = 0x4, fixed_abs, tag = 'smem constant byte address 0x4 - core index']
  #allocation1 [shape = 'u32[144,128]{1,0:T(1,128)}', space=vmem, size = 0x12000, scoped, tag = 'internal scratch']
  %s0 = inlined_call_operand.vmem [shape: f32[8,32], index: 0, kind: input, shape index: {}]
  %s1 = inlined_call_operand.vmem [shape: f32[32,16], index: 1, kind: input, shape index: {}]
  %s2 = inlined_call_operand.vmem [shape: f32[1,16], index: 2, kind: input, shape index: {}]
  %s3 = inlined_call_operand.vmem [shape: f32[32,16], index: 3, kind: input, shape index: {}]
  %s4 = inlined_call_operand.vmem [shape: f32[1,16], index: 4, kind: input, shape index: {}]
  %s5 = inlined_call_operand.hbm [shape: f32[8,16], index: 5, kind: output, shape index: {0}]
  %s6 = inlined_call_operand.hbm [shape: f32[8,16], index: 6, kind: output, shape index: {1}]
  %7 = xla_tuple %s5, %s6
  %s8 = sld [smem:[#allocation0]]
  $region38: #{tpu_custom_call.1} parent=0
    _
  %s10 = ssub.s32 1, %s8
  %s11 = scalar_select 0, %s10, %s8
  $region1: #{tpu_custom_call.1} parent=0
    #allocation2 [shape = 'u8[4096]{0}', space=vmem, size = 0x1000, scoped, tag = 'output window, operand 0, single buffered']
    #allocation3 [shape = 's32[1]{0}', space=sflag, size = 0x4, scoped, tag = 'scoped memory for tpu_custom_call.1']
    #allocation4 [shape = 'u8[4096]{0}', space=vmem, size = 0x1000, scoped, tag = 'output window, operand 1, single buffered']
    #allocation5 [shape = 's32[1]{0}', space=sflag, size = 0x4, scoped, tag = 'scoped memory for tpu_custom_call.1']
    %12 = vsyncpa [#allocation3], 0
    %13 = vsyncpa [#allocation5], 0
    // Predicated region
    $region2: #{tpu_custom_call.1} parent=1 // pred_check
      _
    $region3: #{tpu_custom_call.1} parent=1 // pred_check_branch
      %15 = sbr.rel (0) target = $region5
    $region4: #{tpu_custom_call.1} parent=1 // pred_region
      _
    $region5: #{tpu_custom_call.1} parent=1 // pred_fallthru
      _
    // Predicated region
    $region6: #{tpu_custom_call.1} parent=1 // pred_check
      _
    $region7: #{tpu_custom_call.1} parent=1 // pred_check_branch
      %17 = sbr.rel (0) target = $region9
    $region8: #{tpu_custom_call.1} parent=1 // pred_region
      _
    $region9: #{tpu_custom_call.1} parent=1 // pred_fallthru
      _
    // Predicated region
    $region10: #{tpu_custom_call.1} parent=1 // pred_check
      _
    $region11: #{tpu_custom_call.1} parent=1 // pred_check_branch
      %19 = sbr.rel (0) target = $region13
    $region12: #{tpu_custom_call.1} parent=1 // pred_region
      _
    $region13: #{tpu_custom_call.1} parent=1 // pred_fallthru
      _
    // Predicated region
    $region14: #{tpu_custom_call.1} parent=1 // pred_check
      _
    $region15: #{tpu_custom_call.1} parent=1 // pred_check_branch
      %21 = sbr.rel (0) target = $region17
    $region16: #{tpu_custom_call.1} parent=1 // pred_region
      _
    $region17: #{tpu_custom_call.1} parent=1 // pred_fallthru
      _
    // Predicated region
    $region18: #{tpu_custom_call.1} parent=1 // pred_check
      _
    $region19: #{tpu_custom_call.1} parent=1 // pred_check_branch
      %23 = sbr.rel (0) target = $region21
    $region20: #{tpu_custom_call.1} parent=1 // pred_region
      _
    $region21: #{tpu_custom_call.1} parent=1 // pred_fallthru
      _
    %v24 = vld [vmem:[%s0] sm:$0xff]
    %v25 = vld [vmem:[%s1] sm:$0xff]
    %v26 = vld [vmem:[%s1 + $0x8] sm:$0xff]
    %v27 = vld [vmem:[%s1 + $0x10] sm:$0xff]
    %v28 = vld [vmem:[%s1 + $0x18] sm:$0xff]
    %v29 = vld [vmem:[%s2] sm:$0x1]
    %v31 = vlaneseq
    %v32 = vshrl.u32 %v31, 7
    %v33 = vsub.s32 0, %v32
    %v34 = vrot.slane %v29, %v33
    %vm36 = vcmask 261120
    %v38 = vsel %vm36, %v24, 0
    %40 = vmatprep.subr.mxu0 0.0
    %41 = vmatpush1.msra.mxu0 %v25
    %42 = vmatprep.subr.mxu0 0.0
    %43 = vmatpush1.msra.mxu0 %v26
    %44 = vmatprep.subr.mxu0 0.0
    %45 = vmatpush1.msra.mxu0 %v27
    %46 = vmatprep.subr.mxu0 0.0
    %47 = vmatpush1.msra.mxu0 %v28
    %48 = vmatprep.subr.mxu0 0.0
    %49 = vmatpush1.msra.mxu0 0.0
    %50 = vmatprep.subr.mxu0 0.0
    %51 = vmatpush1.msra.mxu0 0.0
    %52 = vmatprep.subr.mxu0 0.0
    %53 = vmatpush1.msra.mxu0 0.0
    %54 = vmatprep.subr.mxu0 0.0
    %55 = vmatpush1.msra.mxu0 0.0
    %56 = vmatprep.subr.mxu0 0.0
    %57 = vmatpush1.msra.mxu0 0.0
    %58 = vmatprep.subr.mxu0 0.0
    %59 = vmatpush1.msra.mxu0 0.0
    %60 = vmatprep.subr.mxu0 0.0
    %61 = vmatpush1.msra.mxu0 0.0
    %62 = vmatprep.subr.mxu0 0.0
    %63 = vmatpush1.msra.mxu0 0.0
    %64 = vmatprep.subr.mxu0 0.0
    %65 = vmatpush1.msra.mxu0 0.0
    %66 = vmatprep.subr.mxu0 0.0
    %67 = vmatpush1.msra.mxu0 0.0
    %68 = vmatprep.subr.mxu0 0.0
    %69 = vmatpush1.msra.mxu0 0.0
    %70 = vmatprep.subr.mxu0 0.0
    %71 = vmatpush1.msra.mxu0 0.0
    %72 = vmatprep.subr.mxu0 0.0
    %73 = vmatpush1.msra.mxu0 0.0
    %74 = vmatprep.subr.mxu0 0.0
    %75 = vmatpush1.msra.mxu0 0.0
    %76 = vmatprep.subr.mxu0 0.0
    %77 = vmatpush1.msra.mxu0 0.0
    %78 = vmatprep.subr.mxu0 0.0
    %79 = vmatpush1.msra.mxu0 0.0
    %80 = vmatprep.subr.mxu0 0.0
    %81 = vmatpush1.msra.mxu0 0.0
    %82 = vmatprep.subr.mxu0 0.0
    %83 = vmatpush1.msra.mxu0 0.0
    %84 = vmatprep.subr.mxu0 0.0
    %85 = vmatpush1.msra.mxu0 0.0
    %86 = vmatprep.subr.mxu0 0.0
    %87 = vmatpush1.msra.mxu0 0.0
    %88 = vmatprep.subr.mxu0 0.0
    %89 = vmatpush1.msra.mxu0 0.0
    %90 = vmatprep.subr.mxu0 0.0
    %91 = vmatpush1.msra.mxu0 0.0
    %92 = vmatprep.subr.mxu0 0.0
    %93 = vmatpush1.msra.mxu0 0.0
    %94 = vmatprep.subr.mxu0 0.0
    %95 = vmatpush1.msra.mxu0 0.0
    %96 = vmatprep.subr.mxu0 0.0
    %97 = vmatpush1.msra.mxu0 0.0
    %98 = vmatprep.subr.mxu0 0.0
    %99 = vmatpush1.msra.mxu0 0.0
    %100 = vmatprep.subr.mxu0 0.0
    %101 = vmatpush1.msra.mxu0 0.0
    %102 = vmatprep.subr.mxu0 0.0
    %103 = vmatpush1.msra.mxu0 0.0
    %104 = vmatprep.mubr.f32.mxu0 0.0
    %105 = vmatmul.mubr.f32.gmra.mrb[0].mxu0 %v38
    %v106 = vpop.f32.mrb[0].mxu0
    %v107 = vadd.f32 %v34, %v106
    %v108 = vpop.f32.mrb[0].mxu0
    %109 = vdwg.mxu0
    %v110 = vld [vmem:[%s3] sm:$0xff]
    %v111 = vld [vmem:[%s3 + $0x8] sm:$0xff]
    %v112 = vld [vmem:[%s3 + $0x10] sm:$0xff]
    %v113 = vld [vmem:[%s3 + $0x18] sm:$0xff]
    %v114 = vld [vmem:[%s4] sm:$0x1]
    %v116 = vlaneseq
    %v117 = vshrl.u32 %v116, 7
    %v118 = vsub.s32 0, %v117
    %v119 = vrot.slane %v114, %v118
    %121 = vmatprep.subr.mxu0 0.0
    %122 = vmatpush1.msra.mxu0 %v110
    %123 = vmatprep.subr.mxu0 0.0
    %124 = vmatpush1.msra.mxu0 %v111
    %125 = vmatprep.subr.mxu0 0.0
    %126 = vmatpush1.msra.mxu0 %v112
    %127 = vmatprep.subr.mxu0 0.0
    %128 = vmatpush1.msra.mxu0 %v113
    %129 = vmatprep.subr.mxu0 0.0
    %130 = vmatpush1.msra.mxu0 0.0
    %131 = vmatprep.subr.mxu0 0.0
    %132 = vmatpush1.msra.mxu0 0.0
    %133 = vmatprep.subr.mxu0 0.0
    %134 = vmatpush1.msra.mxu0 0.0
    %135 = vmatprep.subr.mxu0 0.0
    %136 = vmatpush1.msra.mxu0 0.0
    %137 = vmatprep.subr.mxu0 0.0
    %138 = vmatpush1.msra.mxu0 0.0
    %139 = vmatprep.subr.mxu0 0.0
    %140 = vmatpush1.msra.mxu0 0.0
    %141 = vmatprep.subr.mxu0 0.0
    %142 = vmatpush1.msra.mxu0 0.0
    %143 = vmatprep.subr.mxu0 0.0
    %144 = vmatpush1.msra.mxu0 0.0
    %145 = vmatprep.subr.mxu0 0.0
    %146 = vmatpush1.msra.mxu0 0.0
    %147 = vmatprep.subr.mxu0 0.0
    %148 = vmatpush1.msra.mxu0 0.0
    %149 = vmatprep.subr.mxu0 0.0
    %150 = vmatpush1.msra.mxu0 0.0
    %151 = vmatprep.subr.mxu0 0.0
    %152 = vmatpush1.msra.mxu0 0.0
    %153 = vmatprep.subr.mxu0 0.0
    %154 = vmatpush1.msra.mxu0 0.0
    %155 = vmatprep.subr.mxu0 0.0
    %156 = vmatpush1.msra.mxu0 0.0
    %157 = vmatprep.subr.mxu0 0.0
    %158 = vmatpush1.msra.mxu0 0.0
    %159 = vmatprep.subr.mxu0 0.0
    %160 = vmatpush1.msra.mxu0 0.0
    %161 = vmatprep.subr.mxu0 0.0
    %162 = vmatpush1.msra.mxu0 0.0
    %163 = vmatprep.subr.mxu0 0.0
    %164 = vmatpush1.msra.mxu0 0.0
    %165 = vmatprep.subr.mxu0 0.0
    %166 = vmatpush1.msra.mxu0 0.0
    %167 = vmatprep.subr.mxu0 0.0
    %168 = vmatpush1.msra.mxu0 0.0
    %169 = vmatprep.subr.mxu0 0.0
    %170 = vmatpush1.msra.mxu0 0.0
    %171 = vmatprep.subr.mxu0 0.0
    %172 = vmatpush1.msra.mxu0 0.0
    %173 = vmatprep.subr.mxu0 0.0
    %174 = vmatpush1.msra.mxu0 0.0
    %175 = vmatprep.subr.mxu0 0.0
    %176 = vmatpush1.msra.mxu0 0.0
    %177 = vmatprep.subr.mxu0 0.0
    %178 = vmatpush1.msra.mxu0 0.0
    %179 = vmatprep.subr.mxu0 0.0
    %180 = vmatpush1.msra.mxu0 0.0
    %181 = vmatprep.subr.mxu0 0.0
    %182 = vmatpush1.msra.mxu0 0.0
    %183 = vmatprep.subr.mxu0 0.0
    %184 = vmatpush1.msra.mxu0 0.0
    %185 = vmatprep.mubr.f32.mxu0 0.0
    %186 = vmatmul.mubr.f32.gmra.mrb[0].mxu0 %v38
    %v187 = vpop.f32.mrb[0].mxu0
    %v188 = vadd.f32 %v119, %v187
    %v189 = vpop.f32.mrb[0].mxu0
    %190 = vdwg.mxu0
    %vm191 = vcmp.gt.f32.partialorder %v188, 20.0
    %v192 = vmin.f32 %v188, 20.0
    %v193 = vmul.f32 %v192, 1.442695
    %v194 = vpow.pop %v193
    %v195 = vadd.f32 %v194, 1.0
    %v196 = vlog2.pop %v195
    %v197 = vmul.f32 %v196, 0.6931472
    %v198 = vmul.f32 -0.5, %v194
    %v199 = vadd.f32 %v198, 1.0
    %v200 = vmul.f32 %v199, %v194
    %v201 = vand.u32 2147483647, %v194
    %vm202 = vcmp.lt.f32.partialorder %v201, 0.0004427343
    %v203 = vsel %vm202, %v200, %v197
    %v204 = vsel %vm191, %v188, %v203
    %vm205 = vcmask 130048
    %206 = vst.msk [vmem:[#allocation2] sm:$0xff] %vm205, %v107
    %207 = vst.msk [vmem:[#allocation4] sm:$0xff] %vm205, %v204
    // Predicated region
    $region22: #{tpu_custom_call.1} parent=1 // pred_check
      _
    $region23: #{tpu_custom_call.1} parent=1 // pred_check_branch
      %209 = sbr.rel (0) target = $region25
    $region24: #{tpu_custom_call.1} parent=1 // pred_region
      %s211 = ssub.s32 128, 128
      %212 = vsyncadd [#allocation3], %s211
      %s214 = sshll.u32 [#allocation2], 4
      %s215 = int_to_ptr.vmem [resolvable:$true] %s214
      %217 = dma.vmem_to_hbm [thread:$0]  %s215, 128, %s5, [#allocation3]
    $region25: #{tpu_custom_call.1} parent=1 // pred_fallthru
      _
    // Predicated region
    $region26: #{tpu_custom_call.1} parent=1 // pred_check
      _
    $region27: #{tpu_custom_call.1} parent=1 // pred_check_branch
      %219 = sbr.rel (0) target = $region29
    $region28: #{tpu_custom_call.1} parent=1 // pred_region
      %s221 = ssub.s32 128, 128
      %222 = vsyncadd [#allocation5], %s221
      %s224 = sshll.u32 [#allocation4], 4
      %s225 = int_to_ptr.vmem [resolvable:$true] %s224
      %227 = dma.vmem_to_hbm [thread:$0]  %s225, 128, %s6, [#allocation5]
    $region29: #{tpu_custom_call.1} parent=1 // pred_fallthru
      _
    // Predicated region
    $region30: #{tpu_custom_call.1} parent=1 // pred_check
      _
    $region31: #{tpu_custom_call.1} parent=1 // pred_check_branch
      %229 = sbr.rel (0) target = $region33
    $region32: #{tpu_custom_call.1} parent=1 // pred_region
      %230 = dma.done [#allocation3], 128
    $region33: #{tpu_custom_call.1} parent=1 // pred_fallthru
      _
    // Predicated region
    $region34: #{tpu_custom_call.1} parent=1 // pred_check
      _
    $region35: #{tpu_custom_call.1} parent=1 // pred_check_branch
      %232 = sbr.rel (0) target = $region37
    $region36: #{tpu_custom_call.1} parent=1 // pred_region
      %233 = dma.done [#allocation5], 128
    $region37: #{tpu_custom_call.1} parent=1 // pred_fallthru
      _
    %234 = vsyncpa [#allocation3], 1
    %235 = vsyncpa [#allocation5], 1

</llo_original>
